<compile_context>
chip_gen: v7x
topology: tpu7x:2x2x1
jax: 0.10.0
libtpu: 0.0.40
codegen_flags: <defaults>
</compile_context>

<pallas_src>
import functools

import jax
import jax.numpy as jnp
from jax.experimental import pallas as pl
from jax.experimental.pallas import tpu as pltpu

HIDDEN = 64
NEG_SLOPE = 0.01  # F.leaky_relu default negative_slope
LANE = 128


def _round_up(n, m):
    return ((n + m - 1) // m) * m


def policy_net_kernel(x_ref, w1_ref, b1_ref, w2_ref, b2_ref, o_ref, *, action_dim):
    # One batch tile per grid step: fc1 -> leaky_relu -> fc2 -> masked softmax.
    x = x_ref[...]          # (TB, S)      f32
    w1 = w1_ref[...]        # (S, H)       f32
    b1 = b1_ref[...]        # (1, H)       f32
    w2 = w2_ref[...]        # (H, A_pad)   f32
    b2 = b2_ref[...]        # (1, A_pad)   f32

    # fc1 + leaky_relu: bf16 MXU inputs, f32 accumulation.
    h = jnp.dot(x.astype(jnp.bfloat16), w1.astype(jnp.bfloat16),
                preferred_element_type=jnp.float32) + b1            # (TB, H)
    h = jnp.where(h >= 0, h, NEG_SLOPE * h)

    # fc2
    logits = jnp.dot(h.astype(jnp.bfloat16), w2.astype(jnp.bfloat16),
                     preferred_element_type=jnp.float32) + b2        # (TB, A_pad)

    # Mask padded action lanes so they contribute 0 to the softmax.
    lane = jax.lax.broadcasted_iota(jnp.int32, logits.shape, 1)
    logits = jnp.where(lane < action_dim, logits, jnp.float32(-1e30))

    # Numerically stable softmax along the lane axis.
    m = jnp.max(logits, axis=-1, keepdims=True)
    e = jnp.exp(logits - m)
    denom = jnp.sum(e, axis=-1, keepdims=True)
    o_ref[...] = (e * pl.reciprocal(denom, approx=True)).astype(o_ref.dtype)


def policy_net_forward(x, w1, b1, w2, b2, *, block_b=512):
    """x: (B, state_dim) f32 -> (B, action_dim) f32 action probabilities.

    Weights are stored pre-transposed as (in_features, out_features).
    """
    B, S = x.shape
    H = w1.shape[1]
    A = w2.shape[1]
    assert w1.shape == (S, H) and b1.shape == (1, H)
    assert w2.shape == (H, A) and b2.shape == (1, A)

    # Lane-dense output: pad the action dim to a full 128-lane register.
    A_pad = _round_up(A, LANE)
    w2p = jnp.zeros((H, A_pad), w2.dtype).at[:, :A].set(w2)
    b2p = jnp.zeros((1, A_pad), b2.dtype).at[:, :A].set(b2)

    # Batch tile: multiple of 8 sublanes; pad B to a whole number of tiles.
    tb = _round_up(min(block_b, _round_up(B, 8)), 8)
    B_pad = _round_up(B, tb)
    if B_pad != B:
        x = jnp.zeros((B_pad, S), x.dtype).at[:B, :].set(x)

    out = pl.pallas_call(
        functools.partial(policy_net_kernel, action_dim=A),
        out_shape=jax.ShapeDtypeStruct((B_pad, A_pad), jnp.float32),
        grid=(B_pad // tb,),
        in_specs=[
            pl.BlockSpec((tb, S), lambda i: (i, 0)),       # x: tiled over batch
            pl.BlockSpec((S, H), lambda i: (0, 0)),        # weights stay resident
            pl.BlockSpec((1, H), lambda i: (0, 0)),
            pl.BlockSpec((H, A_pad), lambda i: (0, 0)),
            pl.BlockSpec((1, A_pad), lambda i: (0, 0)),
        ],
        out_specs=pl.BlockSpec((tb, A_pad), lambda i: (i, 0)),
        compiler_params=pltpu.CompilerParams(
            dimension_semantics=("parallel",)),
    )(x, w1, b1, w2p, b2p)
    return out[:B, :A]


def init_params(key, state_dim, action_dim):
    """Deterministic init mimicking PyTorch Linear defaults (uniform +-1/sqrt(fan_in))."""
    k1, k2, k3, k4 = jax.random.split(key, 4)
    bound1 = 1.0 / jnp.sqrt(jnp.float32(state_dim))
    bound2 = 1.0 / jnp.sqrt(jnp.float32(HIDDEN))
    # Stored as (in_features, out_features) — i.e. PyTorch weight transposed.
    w1 = jax.random.uniform(k1, (state_dim, HIDDEN), jnp.float32, -bound1, bound1)
    b1 = jax.random.uniform(k2, (1, HIDDEN), jnp.float32, -bound1, bound1)
    w2 = jax.random.uniform(k3, (HIDDEN, action_dim), jnp.float32, -bound2, bound2)
    b2 = jax.random.uniform(k4, (1, action_dim), jnp.float32, -bound2, bound2)
    return w1, b1, w2, b2


def _reference(x, w1, b1, w2, b2):
    h = x @ w1 + b1
    h = jnp.where(h >= 0, h, NEG_SLOPE * h)
    return jax.nn.softmax(h @ w2 + b2, axis=1)


if __name__ == "__main__":
    key = jax.random.PRNGKey(0)
    batch, state_dim, action_dim = 8, 4, 2   # CartPole-like dims

    kx, kp = jax.random.split(key)
    x = jax.random.normal(kx, (batch, state_dim), jnp.float32)
    w1, b1, w2, b2 = init_params(kp, state_dim, action_dim)

    probs = jax.block_until_ready(policy_net_forward(x, w1, b1, w2, b2))
    ref = _reference(x, w1, b1, w2, b2)

    assert probs.shape == (batch, action_dim)
    # bf16 matmul inputs + approx reciprocal -> slightly looser tolerances.
    assert jnp.allclose(probs, ref, atol=2e-2, rtol=2e-2)
    assert jnp.allclose(jnp.sum(probs, axis=1), 1.0, atol=5e-3)

    # Second call with a non-multiple batch to exercise the multi-tile,
    # pipelined grid path (and the batch-padding logic).
    xb = jax.random.normal(jax.random.PRNGKey(1), (1000, state_dim), jnp.float32)
    pb = jax.block_until_ready(policy_net_forward(xb, w1, b1, w2, b2, block_b=256))
    refb = _reference(xb, w1, b1, w2, b2)
    assert pb.shape == (1000, action_dim)
    assert jnp.allclose(pb, refb, atol=2e-2, rtol=2e-2)
    assert jnp.allclose(jnp.sum(pb, axis=1), 1.0, atol=5e-3)

    print("KERNEL_OK")
</pallas_src>

<mosaic_0001>
module attributes {stable_mosaic.version = 11 : i64} {
  func.func @policy_net_kernel(%arg0: i32, %arg1: memref<8x4xf32, #tpu.memory_space<vmem>>, %arg2: memref<4x64xf32, #tpu.memory_space<vmem>>, %arg3: memref<1x64xf32, #tpu.memory_space<vmem>>, %arg4: memref<64x128xf32, #tpu.memory_space<vmem>>, %arg5: memref<1x128xf32, #tpu.memory_space<vmem>>, %arg6: memref<8x128xf32, #tpu.memory_space<vmem>>) attributes {dimension_semantics = [#tpu.dimension_semantics<parallel>], iteration_bounds = array<i64: 1>, scalar_prefetch = 0 : i64, scratch_operands = 0 : i64, tpu.core_type = #tpu.core_type<tc>, window_params = [{transform_indices = @transform_0, window_bounds = array<i64: 8, 4>}, {pipeline_mode = #tpu.pipeline_mode<synchronous>, transform_indices = @transform_1, window_bounds = array<i64: 4, 64>}, {pipeline_mode = #tpu.pipeline_mode<synchronous>, transform_indices = @transform_2, window_bounds = array<i64: 1, 64>}, {pipeline_mode = #tpu.pipeline_mode<synchronous>, transform_indices = @transform_3, window_bounds = array<i64: 64, 128>}, {pipeline_mode = #tpu.pipeline_mode<synchronous>, transform_indices = @transform_4, window_bounds = array<i64: 1, 128>}, {transform_indices = @transform_5, window_bounds = array<i64: 8, 128>}]} {
    %c0 = arith.constant 0 : index
    %c0_0 = arith.constant 0 : index
    %0 = vector.load %arg1[%c0, %c0_0] : memref<8x4xf32, #tpu.memory_space<vmem>>, vector<8x4xf32>
    %c0_1 = arith.constant 0 : index
    %c0_2 = arith.constant 0 : index
    %1 = vector.load %arg2[%c0_1, %c0_2] : memref<4x64xf32, #tpu.memory_space<vmem>>, vector<4x64xf32>
    %c0_3 = arith.constant 0 : index
    %c0_4 = arith.constant 0 : index
    %2 = vector.load %arg3[%c0_3, %c0_4] : memref<1x64xf32, #tpu.memory_space<vmem>>, vector<1x64xf32>
    %c0_5 = arith.constant 0 : index
    %c0_6 = arith.constant 0 : index
    %3 = vector.load %arg4[%c0_5, %c0_6] : memref<64x128xf32, #tpu.memory_space<vmem>>, vector<64x128xf32>
    %c0_7 = arith.constant 0 : index
    %c0_8 = arith.constant 0 : index
    %4 = vector.load %arg5[%c0_7, %c0_8] : memref<1x128xf32, #tpu.memory_space<vmem>>, vector<1x128xf32>
    %5 = arith.truncf %0 : vector<8x4xf32> to vector<8x4xbf16>
    %6 = arith.truncf %1 : vector<4x64xf32> to vector<4x64xbf16>
    %cst = arith.constant dense<0.000000e+00> : vector<8x64xf32>
    %7 = tpu.matmul %5, %6, %cst {dimension_numbers = #tpu.dot_dimension_numbers<[1], [0], [0], [1], [0, 0, 1, 1], [], []>} : vector<8x4xbf16>, vector<4x64xbf16>, vector<8x64xf32> -> vector<8x64xf32>
    %8 = vector.broadcast %2 : vector<1x64xf32> to vector<8x64xf32>
    %9 = arith.addf %7, %8 : vector<8x64xf32>
    %cst_9 = arith.constant 0.000000e+00 : f32
    %10 = vector.broadcast %cst_9 : f32 to vector<8x64xf32>
    %11 = arith.cmpf oge, %9, %10 : vector<8x64xf32>
    %cst_10 = arith.constant 0.00999999977 : f32
    %12 = vector.broadcast %cst_10 : f32 to vector<8x64xf32>
    %13 = arith.mulf %12, %9 : vector<8x64xf32>
    %14 = arith.select %11, %9, %13 : vector<8x64xi1>, vector<8x64xf32>
    %15 = arith.truncf %14 : vector<8x64xf32> to vector<8x64xbf16>
    %16 = arith.truncf %3 : vector<64x128xf32> to vector<64x128xbf16>
    %cst_11 = arith.constant dense<0.000000e+00> : vector<8x128xf32>
    %17 = tpu.matmul %15, %16, %cst_11 {dimension_numbers = #tpu.dot_dimension_numbers<[1], [0], [0], [1], [0, 0, 1, 1], [], []>} : vector<8x64xbf16>, vector<64x128xbf16>, vector<8x128xf32> -> vector<8x128xf32>
    %18 = vector.broadcast %4 : vector<1x128xf32> to vector<8x128xf32>
    %19 = arith.addf %17, %18 : vector<8x128xf32>
    %20 = tpu.iota {dimensions = array<i32: 1>} : vector<8x128xi32>
    %c2_i32 = arith.constant 2 : i32
    %21 = vector.broadcast %c2_i32 : i32 to vector<8x128xi32>
    %22 = arith.cmpi slt, %20, %21 : vector<8x128xi32>
    %cst_12 = arith.constant -1.000000e+30 : f32
    %23 = vector.broadcast %cst_12 : f32 to vector<8x128xf32>
    %24 = arith.select %22, %19, %23 : vector<8x128xi1>, vector<8x128xf32>
    %cst_13 = arith.constant dense<0xFF800000> : vector<8xf32>
    %25 = vector.multi_reduction <maximumf>, %24, %cst_13 [1] : vector<8x128xf32> to vector<8xf32>
    %26 = vector.shape_cast %25 : vector<8xf32> to vector<8x1xf32>
    %27 = vector.broadcast %26 : vector<8x1xf32> to vector<8x128xf32>
    %28 = arith.subf %24, %27 : vector<8x128xf32>
    %29 = math.exp %28 : vector<8x128xf32>
    %cst_14 = arith.constant dense<0.000000e+00> : vector<8xf32>
    %30 = vector.multi_reduction <add>, %29, %cst_14 [1] : vector<8x128xf32> to vector<8xf32>
    %31 = vector.shape_cast %30 : vector<8xf32> to vector<8x1xf32>
    %32 = tpu.reciprocal %31 {approx = true} : vector<8x1xf32> -> vector<8x1xf32>
    %33 = vector.broadcast %32 : vector<8x1xf32> to vector<8x128xf32>
    %34 = arith.mulf %29, %33 : vector<8x128xf32>
    %c0_15 = arith.constant 0 : index
    %c0_16 = arith.constant 0 : index
    %35 = vector.load %arg6[%c0_15, %c0_16] : memref<8x128xf32, #tpu.memory_space<vmem>>, vector<8x128xf32>
    tpu.vector_store %arg6[%c0_15, %c0_16], %34 {strides = array<i32>} : memref<8x128xf32, #tpu.memory_space<vmem>>, vector<8x128xf32>,
    return
  }
  func.func @transform_0(%arg0: i32) -> (i32, i32) {
    %c0_i32 = arith.constant 0 : i32
    %c0_i32_0 = arith.constant 0 : i32
    return %arg0, %c0_i32 : i32, i32
  }
  func.func @transform_1(%arg0: i32) -> (i32, i32) {
    %c0_i32 = arith.constant 0 : i32
    %c0_i32_0 = arith.constant 0 : i32
    %c0_i32_1 = arith.constant 0 : i32
    return %c0_i32, %c0_i32_0 : i32, i32
  }
  func.func @transform_2(%arg0: i32) -> (i32, i32) {
    %c0_i32 = arith.constant 0 : i32
    %c0_i32_0 = arith.constant 0 : i32
    %c0_i32_1 = arith.constant 0 : i32
    return %c0_i32, %c0_i32_0 : i32, i32
  }
  func.func @transform_3(%arg0: i32) -> (i32, i32) {
    %c0_i32 = arith.constant 0 : i32
    %c0_i32_0 = arith.constant 0 : i32
    %c0_i32_1 = arith.constant 0 : i32
    return %c0_i32, %c0_i32_0 : i32, i32
  }
  func.func @transform_4(%arg0: i32) -> (i32, i32) {
    %c0_i32 = arith.constant 0 : i32
    %c0_i32_0 = arith.constant 0 : i32
    %c0_i32_1 = arith.constant 0 : i32
    return %c0_i32, %c0_i32_0 : i32, i32
  }
  func.func @transform_5(%arg0: i32) -> (i32, i32) {
    %c0_i32 = arith.constant 0 : i32
    %c0_i32_0 = arith.constant 0 : i32
    return %arg0, %c0_i32 : i32, i32
  }
}

</mosaic_0001>

<llo_original>
// kernel: tpu_custom_call.1
$region0: #{tpu_custom_call.1}
  #allocation0 [shape = 'u32[]', space=smem, size = 0x4, offset = 0x4, fixed_abs, tag = 'smem constant byte address 0x4 - core index']
  #allocation1 [shape = 'u32[144,128]{1,0:T(1,128)}', space=vmem, size = 0x12000, scoped, tag = 'internal scratch']
  %s0 = inlined_call_operand.vmem [shape: f32[8,4], index: 0, kind: input, shape index: {}]
  %s1 = inlined_call_operand.vmem [shape: f32[4,64], index: 1, kind: input, shape index: {}]
  %s2 = inlined_call_operand.vmem [shape: f32[1,64], index: 2, kind: input, shape index: {}]
  %s3 = inlined_call_operand.hbm [shape: f32[64,128], index: 3, kind: input, shape index: {}]
  %s4 = inlined_call_operand.vmem [shape: f32[1,128], index: 4, kind: input, shape index: {}]
  %s5 = inlined_call_operand.hbm [shape: f32[8,128], index: 5, kind: output, shape index: {}]
  %s6 = sld [smem:[#allocation0]]
  $region34: #{tpu_custom_call.1} parent=0
    _
  %s8 = ssub.s32 1, %s6
  %s9 = scalar_select 0, %s8, %s6
  $region1: #{tpu_custom_call.1} parent=0
    #allocation2 [shape = 'u8[32768]{0}', space=vmem, size = 0x8000, scoped, tag = 'input window, operand 3, single buffered']
    #allocation3 [shape = 's32[1]{0}', space=sflag, size = 0x4, scoped, tag = 'scoped memory for tpu_custom_call.1']
    #allocation4 [shape = 's32[1]{0}', space=sflag, size = 0x4, scoped, tag = 'scoped memory for tpu_custom_call.1']
    #allocation5 [shape = 'u8[4096]{0}', space=vmem, size = 0x1000, scoped, tag = 'output window, operand 0, single buffered']
    %10 = vsyncpa [#allocation3], 0
    %11 = vsyncpa [#allocation4], 0
    // Predicated region
    $region2: #{tpu_custom_call.1} parent=1 // pred_check
      _
    $region3: #{tpu_custom_call.1} parent=1 // pred_check_branch
      %13 = sbr.rel (0) target = $region5
    $region4: #{tpu_custom_call.1} parent=1 // pred_region
      _
    $region5: #{tpu_custom_call.1} parent=1 // pred_fallthru
      _
    // Predicated region
    $region6: #{tpu_custom_call.1} parent=1 // pred_check
      _
    $region7: #{tpu_custom_call.1} parent=1 // pred_check_branch
      %15 = sbr.rel (0) target = $region9
    $region8: #{tpu_custom_call.1} parent=1 // pred_region
      _
    $region9: #{tpu_custom_call.1} parent=1 // pred_fallthru
      _
    // Predicated region
    $region10: #{tpu_custom_call.1} parent=1 // pred_check
      _
    $region11: #{tpu_custom_call.1} parent=1 // pred_check_branch
      %17 = sbr.rel (0) target = $region13
    $region12: #{tpu_custom_call.1} parent=1 // pred_region
      _
    $region13: #{tpu_custom_call.1} parent=1 // pred_fallthru
      _
    // Predicated region
    $region14: #{tpu_custom_call.1} parent=1 // pred_check
      _
    $region15: #{tpu_custom_call.1} parent=1 // pred_check_branch
      %19 = sbr.rel (0) target = $region17
    $region16: #{tpu_custom_call.1} parent=1 // pred_region
      %s21 = ssub.s32 1024, 1024
      %22 = vsyncadd [#allocation3], %s21
      %s23 = sshll.u32 [#allocation2], 4
      %s24 = int_to_ptr.vmem [resolvable:$true] %s23
      %29 = dma.hbm_to_vmem [thread:$0]  %s3, 1024, %s24, [#allocation3], 128, 128, 8
    $region17: #{tpu_custom_call.1} parent=1 // pred_fallthru
      _
    // Predicated region
    $region18: #{tpu_custom_call.1} parent=1 // pred_check
      _
    $region19: #{tpu_custom_call.1} parent=1 // pred_check_branch
      %31 = sbr.rel (0) target = $region21
    $region20: #{tpu_custom_call.1} parent=1 // pred_region
      _
    $region21: #{tpu_custom_call.1} parent=1 // pred_fallthru
      _
    // Predicated region
    $region22: #{tpu_custom_call.1} parent=1 // pred_check
      _
    $region23: #{tpu_custom_call.1} parent=1 // pred_check_branch
      %33 = sbr.rel (0) target = $region25
    $region24: #{tpu_custom_call.1} parent=1 // pred_region
      %34 = dma.done [#allocation3], 1024
    $region25: #{tpu_custom_call.1} parent=1 // pred_fallthru
      _
    %v36 = vld [vmem:[%s0] sm:$0xff]
    %v37 = vld [vmem:[%s1] sm:$0xf]
    %v38 = vld [vmem:[%s2] sm:$0x1]
    %v39 = vld [vmem:[#allocation2] sm:$0xff]
    %v40 = vld [vmem:[#allocation2 + $0x8] sm:$0xff]
    %v41 = vld [vmem:[#allocation2 + $0x10] sm:$0xff]
    %v42 = vld [vmem:[#allocation2 + $0x18] sm:$0xff]
    %v43 = vld [vmem:[#allocation2 + $0x20] sm:$0xff]
    %v44 = vld [vmem:[#allocation2 + $0x28] sm:$0xff]
    %v45 = vld [vmem:[#allocation2 + $0x30] sm:$0xff]
    %v46 = vld [vmem:[#allocation2 + $0x38] sm:$0xff]
    %v47 = vld [vmem:[%s4] sm:$0x1]
    %v48 = vpack.c.bf16 %v36, %v36
    %v49 = vpack.c.bf16 %v37, %v37
    %v51 = vlaneseq
    %v52 = vshrl.u32 %v51, 7
    %v53 = vsub.s32 0, %v52
    %v54 = vrot.slane %v38, %v53
    %vm56 = vcmask 31744
    %v58 = vsel %vm56, %v48, 0
    %vm60 = vcmask 1041408
    %v62 = vsel %vm60, %v49, 0
    %64 = vmatprep.subr.bf16.mxu0 0
    %65 = vmatpush1.bf16.msra.mxu0 %v62
    %66 = vmatprep.subr.bf16.mxu0 0
    %67 = vmatpush1.bf16.msra.mxu0 0
    %68 = vmatprep.subr.bf16.mxu0 0
    %69 = vmatpush1.bf16.msra.mxu0 0
    %70 = vmatprep.subr.bf16.mxu0 0
    %71 = vmatpush1.bf16.msra.mxu0 0
    %72 = vmatprep.subr.bf16.mxu0 0
    %73 = vmatpush1.bf16.msra.mxu0 0
    %74 = vmatprep.subr.bf16.mxu0 0
    %75 = vmatpush1.bf16.msra.mxu0 0
    %76 = vmatprep.subr.bf16.mxu0 0
    %77 = vmatpush1.bf16.msra.mxu0 0
    %78 = vmatprep.subr.bf16.mxu0 0
    %79 = vmatpush1.bf16.msra.mxu0 0
    %80 = vmatprep.subr.bf16.mxu0 0
    %81 = vmatpush1.bf16.msra.mxu0 0
    %82 = vmatprep.subr.bf16.mxu0 0
    %83 = vmatpush1.bf16.msra.mxu0 0
    %84 = vmatprep.subr.bf16.mxu0 0
    %85 = vmatpush1.bf16.msra.mxu0 0
    %86 = vmatprep.subr.bf16.mxu0 0
    %87 = vmatpush1.bf16.msra.mxu0 0
    %88 = vmatprep.subr.bf16.mxu0 0
    %89 = vmatpush1.bf16.msra.mxu0 0
    %90 = vmatprep.subr.bf16.mxu0 0
    %91 = vmatpush1.bf16.msra.mxu0 0
    %92 = vmatprep.subr.bf16.mxu0 0
    %93 = vmatpush1.bf16.msra.mxu0 0
    %94 = vmatprep.subr.bf16.mxu0 0
    %95 = vmatpush1.bf16.msra.mxu0 0
    %96 = vmatprep.mubr.bf16.mxu0 0
    %97 = vmatmul.mubr.bf16.gmra.mrb[0].mxu0 %v58
    %v98 = vpop.f32.mrb[0].mxu0
    %v99 = vadd.f32 %v54, %v98
    %v100 = vpop.f32.mrb[0].mxu0
    %v101 = vpop.f32.mrb[0].mxu0
    %v102 = vpop.f32.mrb[0].mxu0
    %103 = vdwg.mxu0
    %vm104 = vcmp.ge.f32.partialorder %v99, 0.0
    %v105 = vmul.f32 %v99, 0.01
    %v106 = vsel %vm104, %v99, %v105
    %v107 = vpack.c.bf16 %v106, %v106
    %v108 = vpack.c.bf16 %v40, %v39
    %v109 = vpack.c.bf16 %v42, %v41
    %v110 = vpack.c.bf16 %v44, %v43
    %v111 = vpack.c.bf16 %v46, %v45
    %v113 = vlaneseq
    %v114 = vshrl.u32 %v113, 7
    %v115 = vsub.s32 0, %v114
    %v116 = vrot.slane %v47, %v115
    %vm118 = vcmask 523264
    %v120 = vsel %vm118, %v107, 0
    %122 = vmatprep.subr.bf16.mxu0 0
    %123 = vmatpush1.bf16.msra.mxu0 %v108
    %124 = vmatprep.subr.bf16.mxu0 0
    %125 = vmatpush1.bf16.msra.mxu0 %v109
    %126 = vmatprep.subr.bf16.mxu0 0
    %127 = vmatpush1.bf16.msra.mxu0 %v110
    %128 = vmatprep.subr.bf16.mxu0 0
    %129 = vmatpush1.bf16.msra.mxu0 %v111
    %130 = vmatprep.subr.bf16.mxu0 0
    %131 = vmatpush1.bf16.msra.mxu0 0
    %132 = vmatprep.subr.bf16.mxu0 0
    %133 = vmatpush1.bf16.msra.mxu0 0
    %134 = vmatprep.subr.bf16.mxu0 0
    %135 = vmatpush1.bf16.msra.mxu0 0
    %136 = vmatprep.subr.bf16.mxu0 0
    %137 = vmatpush1.bf16.msra.mxu0 0
    %138 = vmatprep.subr.bf16.mxu0 0
    %139 = vmatpush1.bf16.msra.mxu0 0
    %140 = vmatprep.subr.bf16.mxu0 0
    %141 = vmatpush1.bf16.msra.mxu0 0
    %142 = vmatprep.subr.bf16.mxu0 0
    %143 = vmatpush1.bf16.msra.mxu0 0
    %144 = vmatprep.subr.bf16.mxu0 0
    %145 = vmatpush1.bf16.msra.mxu0 0
    %146 = vmatprep.subr.bf16.mxu0 0
    %147 = vmatpush1.bf16.msra.mxu0 0
    %148 = vmatprep.subr.bf16.mxu0 0
    %149 = vmatpush1.bf16.msra.mxu0 0
    %150 = vmatprep.subr.bf16.mxu0 0
    %151 = vmatpush1.bf16.msra.mxu0 0
    %152 = vmatprep.subr.bf16.mxu0 0
    %153 = vmatpush1.bf16.msra.mxu0 0
    %154 = vmatprep.mubr.bf16.mxu0 0
    %155 = vmatmul.mubr.bf16.gmra.mrb[0].mxu0 %v120
    %v156 = vpop.f32.mrb[0].mxu0
    %v157 = vadd.f32 %v116, %v156
    %v158 = vpop.f32.mrb[0].mxu0
    %v159 = vpop.f32.mrb[0].mxu0
    %v160 = vpop.f32.mrb[0].mxu0
    %161 = vdwg.mxu0
    %v162 = vlaneseq
    %v163 = vand.u32 %v162, 127
    %vm164 = vcmp.lt.s32.totalorder %v163, 2
    %v165 = vsel %vm164, %v157, -1e+30
    %166 = vmax.xlane.f32.xlu0 %v165
    %v167 = vpop.xlane.xlu0 %166
    %v168 = vsub.f32 %v165, %v167
    %v169 = vmul.f32 %v168, 1.442695
    %v170 = vpow.pop %v169
    %171 = vadd.xlane.f32.xlu0 %v170
    %v172 = vpop.xlane.xlu0 %171
    %v173 = vrcp.pop %v172
    %v174 = vmul.f32 %v170, %v173
    %175 = vst [vmem:[#allocation5] sm:$0xff] %v174
    // Predicated region
    $region26: #{tpu_custom_call.1} parent=1 // pred_check
      _
    $region27: #{tpu_custom_call.1} parent=1 // pred_check_branch
      %177 = sbr.rel (0) target = $region29
    $region28: #{tpu_custom_call.1} parent=1 // pred_region
      %s179 = ssub.s32 128, 128
      %180 = vsyncadd [#allocation4], %s179
      %s182 = sshll.u32 [#allocation5], 4
      %s183 = int_to_ptr.vmem [resolvable:$true] %s182
      %185 = dma.vmem_to_hbm [thread:$0]  %s183, 128, %s5, [#allocation4]
    $region29: #{tpu_custom_call.1} parent=1 // pred_fallthru
      _
    // Predicated region
    $region30: #{tpu_custom_call.1} parent=1 // pred_check
      _
    $region31: #{tpu_custom_call.1} parent=1 // pred_check_branch
      %187 = sbr.rel (0) target = $region33
    $region32: #{tpu_custom_call.1} parent=1 // pred_region
      %188 = dma.done [#allocation4], 128
    $region33: #{tpu_custom_call.1} parent=1 // pred_fallthru
      _
    %189 = vsyncpa [#allocation3], 1
    %190 = vsyncpa [#allocation4], 1

</llo_original>
